<compile_context>
chip_gen: v6e
topology: v6e:2x2x1
jax: 0.10.0
libtpu: 0.0.40
codegen_flags: <defaults>
</compile_context>

<pallas_src>
import jax
import jax.numpy as jnp
from jax.experimental import pallas as pl
from jax.experimental.pallas import tpu as pltpu


def lambda_layer_kernel(x_ref, s_ref, o_ref):
    """One image per grid step.

    x_ref : (1, C*H_out, 2*W)        row r = c*H_out + i holds input rows
                                     (2i, 2i+1) of channel c back to back;
                                     the even row is lanes [0, W).
    s_ref : (W, W_out)               0/1 column-selection matrix, S[2j, j] = 1.
    o_ref : (1, C_out*H_out, W_out)  row-flattened NCHW output.
    """
    rows_in = x_ref.shape[1]            # C * H_out
    W, W_out = s_ref.shape
    rows_out = o_ref.shape[1]           # C_out * H_out
    pad_rows = (rows_out - rows_in) // 2   # (planes // 4) * H_out

    # ---- H subsample: even input rows = contiguous first-W-lane slice ----
    x_even_rows = x_ref[0, :, :W]                               # (C*H_out, W)

    # ---- W subsample: stride-2 lane compaction as one MXU matmul ----
    sub = jnp.dot(x_even_rows, s_ref[...],
                  preferred_element_type=jnp.float32)           # (C*H_out, W_out)

    # ---- channel zero-pad: contiguous row ranges of the flattened output ----
    if pad_rows > 0:
        zeros = jnp.zeros((pad_rows, W_out), o_ref.dtype)
        o_ref[0, :pad_rows, :] = zeros
        o_ref[0, pad_rows + rows_in:, :] = zeros
    o_ref[0, pad_rows:pad_rows + rows_in, :] = sub.astype(o_ref.dtype)


def lambda_layer(x_nchw, planes):
    """ResNet option-A shortcut: x[:, :, ::2, ::2] zero-padded by planes//4
    channels on each side.  NCHW in, (N, C + 2*(planes//4), H//2, W//2) out."""
    N, C, H, W = x_nchw.shape
    assert H % 2 == 0 and W % 2 == 0, "even spatial dims only (see TODO above)"
    H_out, W_out = H // 2, W // 2
    pad = planes // 4
    C_out = C + 2 * pad

    x = x_nchw.astype(jnp.float32)
    # Free metadata reshape: (N, C, H, W) -> (N, C*H_out, 2*W).
    x2 = x.reshape(N, C * H_out, 2 * W)

    # 0/1 selection matrix that picks every other input column.
    sel = (jnp.arange(W)[:, None] == 2 * jnp.arange(W_out)[None, :]
           ).astype(jnp.float32)

    out_flat = pl.pallas_call(
        lambda_layer_kernel,
        out_shape=jax.ShapeDtypeStruct((N, C_out * H_out, W_out), jnp.float32),
        grid_spec=pltpu.PrefetchScalarGridSpec(
            num_scalar_prefetch=0,
            grid=(N,),                                      # one image / step
            in_specs=[
                pl.BlockSpec((1, C * H_out, 2 * W), lambda n: (n, 0, 0)),
                # constant block index -> stays resident, not re-DMAed per step
                pl.BlockSpec((W, W_out), lambda n: (0, 0)),
            ],
            out_specs=pl.BlockSpec((1, C_out * H_out, W_out),
                                   lambda n: (n, 0, 0)),
        ),
        compiler_params=pltpu.CompilerParams(
            dimension_semantics=("parallel",),              # megacore on v7x
            vmem_limit_bytes=32 * 1024 * 1024,
        ),
    )(x2, sel)

    return out_flat.reshape(N, C_out, H_out, W_out)


def _reference(x, planes):
    # Pure-JAX reference for the lambda wrapped by LambdaLayer in lib/resnet.py.
    pad = planes // 4
    sub = x[:, :, ::2, ::2]
    return jnp.pad(sub, ((0, 0), (pad, pad), (0, 0), (0, 0)))


if __name__ == "__main__":
    key = jax.random.PRNGKey(0)
    N, C, H, W = 2, 4, 16, 16
    planes = 2 * C                      # as used by BasicBlock option-A (stride 2)

    x = jax.random.normal(key, (N, C, H, W), jnp.float32)
    # Round the test data to bf16 precision so the 0/1 selection matmul is
    # bit-exact regardless of how many bf16 passes the MXU uses for f32.
    x = x.astype(jnp.bfloat16).astype(jnp.float32)

    out = jax.block_until_ready(lambda_layer(x, planes))
    ref = jax.block_until_ready(_reference(x, planes))

    assert out.shape == (N, C + 2 * (planes // 4), H // 2, W // 2), out.shape
    err = jnp.max(jnp.abs(out - ref))
    assert jnp.allclose(out, ref, atol=1e-5, rtol=1e-5), f"max abs err {err}"

    print("KERNEL_OK")
</pallas_src>

<mosaic_0001>
module attributes {stable_mosaic.version = 11 : i64} {
  func.func @lambda_layer_kernel(%arg0: i32, %arg1: memref<1x32x32xf32, #tpu.memory_space<vmem>>, %arg2: memref<16x8xf32, #tpu.memory_space<vmem>>, %arg3: memref<1x64x8xf32, #tpu.memory_space<vmem>>) attributes {dimension_semantics = [#tpu.dimension_semantics<parallel>], iteration_bounds = array<i64: 2>, scalar_prefetch = 0 : i64, scratch_operands = 0 : i64, tpu.core_type = #tpu.core_type<tc>, window_params = [{transform_indices = @transform_0, window_bounds = array<i64: 1, 32, 32>}, {pipeline_mode = #tpu.pipeline_mode<synchronous>, transform_indices = @transform_1, window_bounds = array<i64: 16, 8>}, {transform_indices = @transform_2, window_bounds = array<i64: 1, 64, 8>}]} {
    %c0 = arith.constant 0 : index
    %c0_0 = arith.constant 0 : index
    %c0_1 = arith.constant 0 : index
    %0 = vector.load %arg1[%c0, %c0_0, %c0_1] : memref<1x32x32xf32, #tpu.memory_space<vmem>>, vector<1x32x16xf32>
    %1 = vector.shape_cast %0 : vector<1x32x16xf32> to vector<32x16xf32>
    %c0_2 = arith.constant 0 : index
    %c0_3 = arith.constant 0 : index
    %2 = vector.load %arg2[%c0_2, %c0_3] : memref<16x8xf32, #tpu.memory_space<vmem>>, vector<16x8xf32>
    %cst = arith.constant dense<0.000000e+00> : vector<32x8xf32>
    %3 = tpu.matmul %1, %2, %cst {dimension_numbers = #tpu.dot_dimension_numbers<[1], [0], [0], [1], [0, 0, 1, 1], [], []>} : vector<32x16xf32>, vector<16x8xf32>, vector<32x8xf32> -> vector<32x8xf32>
    %cst_4 = arith.constant 0.000000e+00 : f32
    %4 = vector.broadcast %cst_4 : f32 to vector<16x8xf32>
    %c0_5 = arith.constant 0 : index
    %c0_6 = arith.constant 0 : index
    %c0_7 = arith.constant 0 : index
    %5 = vector.load %arg3[%c0_5, %c0_6, %c0_7] : memref<1x64x8xf32, #tpu.memory_space<vmem>>, vector<1x16x8xf32>
    %6 = vector.shape_cast %5 : vector<1x16x8xf32> to vector<16x8xf32>
    %7 = vector.shape_cast %4 : vector<16x8xf32> to vector<1x16x8xf32>
    tpu.vector_store %arg3[%c0_5, %c0_6, %c0_7], %7 {strides = array<i32>} : memref<1x64x8xf32, #tpu.memory_space<vmem>>, vector<1x16x8xf32>,
    %c0_8 = arith.constant 0 : index
    %c48 = arith.constant 48 : index
    %c0_9 = arith.constant 0 : index
    %8 = vector.load %arg3[%c0_8, %c48, %c0_9] : memref<1x64x8xf32, #tpu.memory_space<vmem>>, vector<1x16x8xf32>
    %9 = vector.shape_cast %8 : vector<1x16x8xf32> to vector<16x8xf32>
    %10 = vector.shape_cast %4 : vector<16x8xf32> to vector<1x16x8xf32>
    tpu.vector_store %arg3[%c0_8, %c48, %c0_9], %10 {strides = array<i32>} : memref<1x64x8xf32, #tpu.memory_space<vmem>>, vector<1x16x8xf32>,
    %c0_10 = arith.constant 0 : index
    %c16 = arith.constant 16 : index
    %c0_11 = arith.constant 0 : index
    %11 = vector.load %arg3[%c0_10, %c16, %c0_11] : memref<1x64x8xf32, #tpu.memory_space<vmem>>, vector<1x32x8xf32>
    %12 = vector.shape_cast %11 : vector<1x32x8xf32> to vector<32x8xf32>
    %13 = vector.shape_cast %3 : vector<32x8xf32> to vector<1x32x8xf32>
    tpu.vector_store %arg3[%c0_10, %c16, %c0_11], %13 {strides = array<i32>} : memref<1x64x8xf32, #tpu.memory_space<vmem>>, vector<1x32x8xf32>,
    return
  }
  func.func @transform_0(%arg0: i32) -> (i32, i32, i32) {
    %c0_i32 = arith.constant 0 : i32
    %c0_i32_0 = arith.constant 0 : i32
    %c0_i32_1 = arith.constant 0 : i32
    return %arg0, %c0_i32, %c0_i32_0 : i32, i32, i32
  }
  func.func @transform_1(%arg0: i32) -> (i32, i32) {
    %c0_i32 = arith.constant 0 : i32
    %c0_i32_0 = arith.constant 0 : i32
    %c0_i32_1 = arith.constant 0 : i32
    return %c0_i32, %c0_i32_0 : i32, i32
  }
  func.func @transform_2(%arg0: i32) -> (i32, i32, i32) {
    %c0_i32 = arith.constant 0 : i32
    %c0_i32_0 = arith.constant 0 : i32
    %c0_i32_1 = arith.constant 0 : i32
    return %arg0, %c0_i32, %c0_i32_0 : i32, i32, i32
  }
}

</mosaic_0001>

<llo_original>
// kernel: tpu_custom_call.1
$region0: #{tpu_custom_call.1}
  #allocation0 [shape = 'u32[]', space=smem, size = 0x4, offset = 0x4, fixed_abs, tag = 'smem constant byte address 0x4 - core index']
  #allocation1 [shape = 'u32[144,128]{1,0:T(1,128)}', space=vmem, size = 0x12000, scoped, tag = 'internal scratch']
  %s0 = inlined_call_operand.hbm [shape: f32[2,32,32], index: 0, kind: input, shape index: {}]
  %s1 = inlined_call_operand.vmem [shape: f32[16,8], index: 1, kind: input, shape index: {}]
  %s2 = inlined_call_operand.vmem [shape: f32[2,64,8], index: 2, kind: output, shape index: {}]
  %s3 = sld [smem:[#allocation0]]
  $region45: #{tpu_custom_call.1} parent=0
    _
  %s5 = ssub.s32 1, %s3
  %s6 = scalar_select 0, %s5, %s3
  $region1: #{tpu_custom_call.1} parent=0
    #allocation2 [shape = 'u8[32768]{0}', space=vmem, size = 0x8000, scoped, tag = 'input window, operand 0']
    #allocation3 [shape = 's32[2]{0}', space=sflag, size = 0x8, scoped, tag = 'scoped memory for tpu_custom_call.1']
    %7 = vsyncpa [#allocation3], 0
    %s8 = scalar_lea.sflag [#allocation3], 1
    %9 = vsyncpa %s8, 0
    loop: start=0, step=1, limit=4
    $region2: #{tpu_custom_call.1} parent=1 // loop_pre_header
      _
    $region3: #{tpu_custom_call.1} parent=1 // loop_header
      %s11 = sphi 0, %s15
      %p12 = scmp.ge.s32.totalorder %s11, 4
      %s21 = sphi 0, %s23
      %s24 = sphi 0, %s21
      %s25 = sphi 0, %s24
      %s41 = sphi 0, %s25
      %s45 = sphi 0, %s45
      %s47 = sphi 0, %s45
      %s48 = sphi 0, %s47
      %s62 = sphi 0, %s48
      %s68 = sphi 0, %s70
      %s71 = sphi 0, %s68
      %s72 = sphi 0, %s71
      %s88 = sphi 0, %s72
    $region4: #{tpu_custom_call.1} parent=1 // loop_header_branch
      %14 = sbr.rel (%p12) target = $region8
    $region5: #{tpu_custom_call.1} parent=1 // loop_body
      %s16 = ssub.s32 %s11, 1
      %s17 = ssub.s32 %s11, 2
      %s18 = sadd.s32 %s11, 1
      %s19 = ssub.s32 %s11, %s18
      %p20 = scmp.eq.s32.totalorder %s19, 0
      %s22 = sadd.s32 %s21, 1
      %s23 = scalar_select %p20, %s21, %s22
      %p26 = pneg %p20
      %p27 = scmp.eq.s32.totalorder %s11, 1
      %p28 = por %p26, %p27
      %p29 = scmp.ne.s32.totalorder %s21, %s24
      %p30 = scmp.eq.s32.totalorder %s11, 0
      %p31 = por %p29, %p30
      %p32 = scmp.ne.s32.totalorder %s21, %s24
      %p33 = scmp.eq.s32.totalorder %s16, 1
      %p34 = por %p32, %p33
      %p35 = scmp.ne.s32.totalorder %s24, %s25
      %p36 = scmp.eq.s32.totalorder %s16, 0
      %p37 = por %p35, %p36
      %p38 = scmp.ne.s32.totalorder %s24, %s25
      %p39 = scmp.eq.s32.totalorder %s17, 1
      %p40 = por %p38, %p39
      %p42 = scmp.ne.s32.totalorder %s25, %s41
      %p43 = scmp.eq.s32.totalorder %s17, 0
      %p44 = por %p42, %p43
      %s46 = sadd.s32 %s45, 1
      %p49 = scmp.eq.s32.totalorder %s11, 1
      %p50 = scmp.ne.s32.totalorder %s45, %s47
      %p51 = scmp.eq.s32.totalorder %s11, 0
      %p52 = por %p50, %p51
      %p53 = scmp.ne.s32.totalorder %s45, %s47
      %p54 = scmp.eq.s32.totalorder %s16, 1
      %p55 = por %p53, %p54
      %p56 = scmp.ne.s32.totalorder %s47, %s48
      %p57 = scmp.eq.s32.totalorder %s16, 0
      %p58 = por %p56, %p57
      %p59 = scmp.ne.s32.totalorder %s47, %s48
      %p60 = scmp.eq.s32.totalorder %s17, 1
      %p61 = por %p59, %p60
      %p63 = scmp.ne.s32.totalorder %s48, %s62
      %p64 = scmp.eq.s32.totalorder %s17, 0
      %p65 = por %p63, %p64
      %s66 = ssub.s32 %s11, %s18
      %p67 = scmp.eq.s32.totalorder %s66, 0
      %s69 = sadd.s32 %s68, 1
      %s70 = scalar_select %p67, %s68, %s69
      %p73 = pneg %p67
      %p74 = scmp.eq.s32.totalorder %s11, 1
      %p75 = por %p73, %p74
      %p76 = scmp.ne.s32.totalorder %s68, %s71
      %p77 = scmp.eq.s32.totalorder %s11, 0
      %p78 = por %p76, %p77
      %p79 = scmp.ne.s32.totalorder %s68, %s71
      %p80 = scmp.eq.s32.totalorder %s16, 1
      %p81 = por %p79, %p80
      %p82 = scmp.ne.s32.totalorder %s71, %s72
      %p83 = scmp.eq.s32.totalorder %s16, 0
      %p84 = por %p82, %p83
      %p85 = scmp.ne.s32.totalorder %s71, %s72
      %p86 = scmp.eq.s32.totalorder %s17, 1
      %p87 = por %p85, %p86
      %p89 = scmp.ne.s32.totalorder %s72, %s88
      %p90 = scmp.eq.s32.totalorder %s17, 0
      %p91 = por %p89, %p90
      %p92 = scmp.le.s32.totalorder 1, %s11
      %p93 = scmp.lt.s32.totalorder %s11, 3
      %p94 = pnand %p92, %p93
      %p95 = pneg %p94
      // Predicated region
      $region9: #{tpu_custom_call.1} parent=5 // pred_check
        _
      $region10: #{tpu_custom_call.1} parent=5 // pred_check_branch
        %97 = sbr.rel (%p94) target = $region12
      $region11: #{tpu_custom_call.1} parent=5 // pred_region
        %s98 = ssub.s32 %s11, 1
        // Predicated region
        $region13: #{tpu_custom_call.1} parent=11 // pred_check
          %p99 = pneg %p58
        $region14: #{tpu_custom_call.1} parent=11 // pred_check_branch
          %101 = sbr.rel (%p99) target = $region16
        $region15: #{tpu_custom_call.1} parent=11 // pred_region
          _
        $region16: #{tpu_custom_call.1} parent=11 // pred_fallthru
          _
      $region12: #{tpu_custom_call.1} parent=5 // pred_fallthru
        _
      %p102 = scmp.lt.s32.totalorder %s11, 2
      // Predicated region
      $region17: #{tpu_custom_call.1} parent=5 // pred_check
        %p103 = pneg %p102
      $region18: #{tpu_custom_call.1} parent=5 // pred_check_branch
        %105 = sbr.rel (%p103) target = $region20
      $region19: #{tpu_custom_call.1} parent=5 // pred_region
        // Predicated region
        $region21: #{tpu_custom_call.1} parent=19 // pred_check
          %p106 = pneg %p31
        $region22: #{tpu_custom_call.1} parent=19 // pred_check_branch
          %108 = sbr.rel (%p106) target = $region24
        $region23: #{tpu_custom_call.1} parent=19 // pred_region
          %s109 = sand.u32 %s21, 1
          %s110 = scalar_lea.sflag [#allocation3], %s109
          %s111 = sand.u32 %s21, 1
          %s112 = smul.addr %s111, 32
          %s113 = scalar_lea.vmem [#allocation2], %s112
          %s115 = ssub.s32 512, 512
          %116 = vsyncadd %s110, %s115
          %s117 = smul.addr %s11, 4
          %s118 = smul.addr %s117, 128
          %s119 = scalar_lea.hbm %s0, %s118
          %s120 = sshll.u32 %s113, 4
          %s121 = int_to_ptr.vmem [resolvable:$true] %s120
          %126 = dma.hbm_to_vmem [thread:$0]  %s119, 512, %s121, %s110, 128, 128, 8
        $region24: #{tpu_custom_call.1} parent=19 // pred_fallthru
          _
      $region20: #{tpu_custom_call.1} parent=5 // pred_fallthru
        _
      %p127 = scmp.le.s32.totalorder 1, %s11
      %p128 = scmp.lt.s32.totalorder %s11, 3
      %p129 = pnand %p127, %p128
      %p130 = pneg %p129
      // Predicated region
      $region25: #{tpu_custom_call.1} parent=5 // pred_check
        _
      $region26: #{tpu_custom_call.1} parent=5 // pred_check_branch
        %132 = sbr.rel (%p129) target = $region28
      $region27: #{tpu_custom_call.1} parent=5 // pred_region
        %s133 = ssub.s32 %s11, 1
        %s134 = sand.u32 %s24, 1
        %s135 = scalar_lea.sflag [#allocation3], %s134
        %s136 = sand.u32 %s24, 1
        %s137 = smul.addr %s136, 32
        %s138 = scalar_lea.vmem [#allocation2], %s137
        // Predicated region
        $region29: #{tpu_custom_call.1} parent=27 // pred_check
          %p139 = pneg %p37
        $region30: #{tpu_custom_call.1} parent=27 // pred_check_branch
          %141 = sbr.rel (%p139) target = $region32
        $region31: #{tpu_custom_call.1} parent=27 // pred_region
          %142 = dma.done %s135, 512
        $region32: #{tpu_custom_call.1} parent=27 // pred_fallthru
          _
        %s143 = sand.u32 %s24, 1
        %s144 = scalar_lea.sflag [#allocation3], %s143
        %s145 = sand.u32 %s24, 1
        %s146 = smul.addr %s145, 32
        %s147 = scalar_lea.vmem [#allocation2], %s146
        %p148 = pneg %p37
        %p149 = pneg %p34
        %p150 = pneg %p58
        %p151 = pneg %p55
        %p152 = pneg %p84
        %p153 = pneg %p81
        %p154 = scmp.lt.s32.totalorder %s16, 1
        %s155 = scalar_select %p154, %s16, 1
        %s156 = smul.addr %s155, 8
        %s157 = smul.addr %s156, 8
        %s158 = scalar_lea.vmem %s2, %s157
        %p159 = scmp.lt.s32.totalorder %s16, 1
        %s160 = scalar_select %p159, %s16, 1
        %s161 = smul.addr %s160, 8
        %s162 = smul.addr %s161, 8
        %s163 = scalar_lea.vmem %s2, %s162
        %v164 = vld [vmem:[%s138] sm:$0xff]
        %v165 = vld [vmem:[%s138 + $0x8] sm:$0xff]
        %v166 = vld [vmem:[%s138 + $0x10] sm:$0xff]
        %v167 = vld [vmem:[%s138 + $0x18] sm:$0xff]
        %v168 = vld [vmem:[%s1] sm:$0xff]
        %v169 = vld [vmem:[%s1 + $0x8] sm:$0xff]
        %vm170 = vcmask 130048
        %v172 = vsel %vm170, %v164, 0
        %v175 = vsel %vm170, %v165, 0
        %v178 = vsel %vm170, %v166, 0
        %v181 = vsel %vm170, %v167, 0
        %183 = vmatprep.subr.mxu0 0.0
        %184 = vmatpush1.msra.mxu0 0.0
        %185 = vmatprep.subr.mxu0 0.0
        %186 = vmatpush1.msra.mxu0 0.0
        %187 = vmatprep.subr.mxu0 0.0
        %188 = vmatpush1.msra.mxu0 0.0
        %189 = vmatprep.subr.mxu0 0.0
        %190 = vmatpush1.msra.mxu0 0.0
        %191 = vmatprep.subr.mxu0 0.0
        %192 = vmatpush1.msra.mxu0 0.0
        %193 = vmatprep.subr.mxu0 0.0
        %194 = vmatpush1.msra.mxu0 0.0
        %195 = vmatprep.subr.mxu0 0.0
        %196 = vmatpush1.msra.mxu0 0.0
        %197 = vmatprep.subr.mxu0 0.0
        %198 = vmatpush1.msra.mxu0 0.0
        %199 = vmatprep.subr.mxu0 0.0
        %200 = vmatpush1.msra.mxu0 0.0
        %201 = vmatprep.subr.mxu0 0.0
        %202 = vmatpush1.msra.mxu0 0.0
        %203 = vmatprep.subr.mxu0 0.0
        %204 = vmatpush1.msra.mxu0 0.0
        %205 = vmatprep.subr.mxu0 0.0
        %206 = vmatpush1.msra.mxu0 0.0
        %207 = vmatprep.subr.mxu0 0.0
        %208 = vmatpush1.msra.mxu0 0.0
        %209 = vmatprep.subr.mxu0 0.0
        %210 = vmatpush1.msra.mxu0 0.0
        %211 = vmatprep.subr.mxu0 0.0
        %212 = vmatpush1.msra.mxu0 %v169
        %213 = vmatprep.subr.mxu0 0.0
        %214 = vmatpush1.msra.mxu0 %v168
        %215 = vmatprep.subr.mxu0 0.0
        %216 = vmatpush2.msra.mxu0 0.0
        %217 = vmatprep.subr.mxu0 0.0
        %218 = vmatpush2.msra.mxu0 0.0
        %219 = vmatprep.subr.mxu0 0.0
        %220 = vmatpush2.msra.mxu0 0.0
        %221 = vmatprep.subr.mxu0 0.0
        %222 = vmatpush2.msra.mxu0 0.0
        %223 = vmatprep.subr.mxu0 0.0
        %224 = vmatpush2.msra.mxu0 0.0
        %225 = vmatprep.subr.mxu0 0.0
        %226 = vmatpush2.msra.mxu0 0.0
        %227 = vmatprep.subr.mxu0 0.0
        %228 = vmatpush2.msra.mxu0 0.0
        %229 = vmatprep.subr.mxu0 0.0
        %230 = vmatpush2.msra.mxu0 0.0
        %231 = vmatprep.subr.mxu0 0.0
        %232 = vmatpush2.msra.mxu0 0.0
        %233 = vmatprep.subr.mxu0 0.0
        %234 = vmatpush2.msra.mxu0 0.0
        %235 = vmatprep.subr.mxu0 0.0
        %236 = vmatpush2.msra.mxu0 0.0
        %237 = vmatprep.subr.mxu0 0.0
        %238 = vmatpush2.msra.mxu0 0.0
        %239 = vmatprep.subr.mxu0 0.0
        %240 = vmatpush2.msra.mxu0 0.0
        %241 = vmatprep.subr.mxu0 0.0
        %242 = vmatpush2.msra.mxu0 0.0
        %243 = vmatprep.subr.mxu0 0.0
        %244 = vmatpush2.msra.mxu0 0.0
        %245 = vmatprep.subr.mxu0 0.0
        %246 = vmatpush2.msra.mxu0 0.0
        %247 = vmatprep.mubr.f32.mxu0 0.0
        %248 = vmatmul.mubr.f32.gmra.mxu0 %v172
        %v249 = vpop.f32.mrf.mxu0
        %v250 = vadd.f32 0.0, %v249
        %v251 = vpop.f32.mrf.mxu0
        %252 = vmatprep.mubr.f32.mxu0 0.0
        %253 = vmatmul.mubr.f32.gmra.mxu0 %v175
        %v254 = vpop.f32.mrf.mxu0
        %v255 = vadd.f32 0.0, %v254
        %v256 = vpop.f32.mrf.mxu0
        %257 = vmatprep.mubr.f32.mxu0 0.0
        %258 = vmatmul.mubr.f32.gmra.mxu0 %v178
        %v259 = vpop.f32.mrf.mxu0
        %v260 = vadd.f32 0.0, %v259
        %v261 = vpop.f32.mrf.mxu0
        %262 = vmatprep.mubr.f32.mxu0 0.0
        %263 = vmatmul.mubr.f32.gmra.mxu0 %v181
        %v264 = vpop.f32.mrf.mxu0
        %v265 = vadd.f32 0.0, %v264
        %v266 = vpop.f32.mrf.mxu0
        %267 = vdwg.mxu0
        %vm268 = vcmask 64512
        %269 = vst.msk [vmem:[%s163] sm:$0xff] %vm268, 0.0
        %270 = vst.msk [vmem:[%s163 + $0x8] sm:$0xff] %vm268, 0.0
        %271 = vst.msk [vmem:[%s163 + $0x30] sm:$0xff] %vm268, 0.0
        %272 = vst.msk [vmem:[%s163 + $0x38] sm:$0xff] %vm268, 0.0
        %273 = vst.msk [vmem:[%s163 + $0x10] sm:$0xff] %vm268, %v250
        %274 = vst.msk [vmem:[%s163 + $0x18] sm:$0xff] %vm268, %v255
        %275 = vst.msk [vmem:[%s163 + $0x20] sm:$0xff] %vm268, %v260
        %276 = vst.msk [vmem:[%s163 + $0x28] sm:$0xff] %vm268, %v265
        %p277 = scmp.lt.s32.totalorder %s16, 1
        %s278 = scalar_select %p277, %s16, 1
        %s279 = smul.addr %s278, 8
        %s280 = smul.addr %s279, 8
        %s281 = scalar_lea.vmem %s2, %s280
        // Predicated region
        $region33: #{tpu_custom_call.1} parent=27 // pred_check
          %p282 = pneg %p81
        $region34: #{tpu_custom_call.1} parent=27 // pred_check_branch
          %284 = sbr.rel (%p282) target = $region36
        $region35: #{tpu_custom_call.1} parent=27 // pred_region
          _
        $region36: #{tpu_custom_call.1} parent=27 // pred_fallthru
          _
      $region28: #{tpu_custom_call.1} parent=5 // pred_fallthru
        _
      %p285 = scmp.le.s32.totalorder 2, %s11
      // Predicated region
      $region37: #{tpu_custom_call.1} parent=5 // pred_check
        %p286 = pneg %p285
      $region38: #{tpu_custom_call.1} parent=5 // pred_check_branch
        %288 = sbr.rel (%p286) target = $region40
      $region39: #{tpu_custom_call.1} parent=5 // pred_region
        %s289 = ssub.s32 %s11, 2
        // Predicated region
        $region41: #{tpu_custom_call.1} parent=39 // pred_check
          %p290 = pneg %p87
        $region42: #{tpu_custom_call.1} parent=39 // pred_check_branch
          %292 = sbr.rel (%p290) target = $region44
        $region43: #{tpu_custom_call.1} parent=39 // pred_region
          %p293 = scmp.lt.s32.totalorder %s17, 1
          %s294 = scalar_select %p293, %s17, 1
          %s295 = smul.addr %s294, 8
          %s296 = smul.addr %s295, 8
          %s297 = scalar_lea.vmem %s2, %s296
        $region44: #{tpu_custom_call.1} parent=39 // pred_fallthru
          _
      $region40: #{tpu_custom_call.1} parent=5 // pred_fallthru
        _
    $region6: #{tpu_custom_call.1} parent=1 // loop_footer
      %s15 = sadd.s32 1, %s11
    $region7: #{tpu_custom_call.1} parent=1 // loop_footer_branch
      %10 = sbr.rel target = $region3
    $region8: #{tpu_custom_call.1} parent=1 // loop_exit
      _
    %298 = vsyncpa [#allocation3], 1
    %s299 = scalar_lea.sflag [#allocation3], 1
    %300 = vsyncpa %s299, 1

</llo_original>
